<compile_context>
chip_gen: v5e
topology: v5e:2x2
jax: 0.10.0
libtpu: 0.0.40
codegen_flags: <defaults>
</compile_context>

<pallas_src>
import jax
import jax.numpy as jnp
from jax.experimental import pallas as pl
from jax.experimental.pallas import tpu as pltpu


def _round_up(n, m):
    return ((n + m - 1) // m) * m


def _autoencoder_kernel(x_ref,
                        w1_ref, b1_ref, w2_ref, b2_ref, w34_ref, b34_ref,
                        w5_ref, b5_ref, w6_ref, b6_ref,
                        out_ref):
    # Matmul operands in bf16 (weight dtype), accumulate in f32, elementwise f32.
    h = x_ref[...]

    # ---------------- encoder ----------------
    h = jnp.dot(h.astype(w1_ref.dtype), w1_ref[...],
                preferred_element_type=jnp.float32) + b1_ref[...]
    h = jnp.maximum(h, 0.0)                                        # ReLU
    h = jnp.dot(h.astype(w2_ref.dtype), w2_ref[...],
                preferred_element_type=jnp.float32) + b2_ref[...]
    h = jnp.maximum(h, 0.0)                                        # ReLU

    # ---- fused: encoder Linear(64, latent) o decoder Linear(latent, 64) ----
    # (no nonlinearity on the latent, so W34 = W3 @ W4 is exact)
    h = jnp.dot(h.astype(w34_ref.dtype), w34_ref[...],
                preferred_element_type=jnp.float32) + b34_ref[...]
    h = jnp.maximum(h, 0.0)                                        # ReLU

    # ---------------- decoder tail ----------------
    h = jnp.dot(h.astype(w5_ref.dtype), w5_ref[...],
                preferred_element_type=jnp.float32) + b5_ref[...]
    h = jnp.maximum(h, 0.0)                                        # ReLU
    h = jnp.dot(h.astype(w6_ref.dtype), w6_ref[...],
                preferred_element_type=jnp.float32) + b6_ref[...]
    out_ref[...] = jax.nn.sigmoid(h).astype(out_ref.dtype)         # Sigmoid


def prepare_params(params, input_size, *, compute_dtype=jnp.bfloat16):
    """One-time param prep.

    params: list of 6 (w, b), w stored transposed (in_features, out_features).
      1. Fuse layers 3 & 4 in f32 (no nonlinearity on the latent) -> 5 layers.
      2. Zero-pad every feature dim up to a multiple of 128 lanes (exact:
         zero weight columns -> zero activations -> zero contribution).
      3. Cast weights to bf16 for the MXU; keep biases as f32 rows.
    """
    (w1, b1), (w2, b2), (w3, b3), (w4, b4), (w5, b5), (w6, b6) = params
    w34 = w3 @ w4                      # f32 composition BEFORE the bf16 cast
    b34 = b3 @ w4 + b4
    layers = [(w1, b1), (w2, b2), (w34, b34), (w5, b5), (w6, b6)]

    prepped = []
    prev_out_pad = _round_up(input_size, 128)
    for (w, b) in layers:
        fan_in, fan_out = w.shape
        fi_p = prev_out_pad            # == round_up(fan_in, 128) (chained)
        fo_p = _round_up(fan_out, 128)
        w_p = jnp.zeros((fi_p, fo_p), compute_dtype)
        w_p = w_p.at[:fan_in, :fan_out].set(w.astype(compute_dtype))
        b_p = jnp.zeros((1, fo_p), jnp.float32)
        b_p = b_p.at[0, :fan_out].set(b.astype(jnp.float32))
        prepped.append((w_p, b_p))
        prev_out_pad = fo_p
    return prepped


def autoencoder_forward(x, prepared_params, *, batch_tile=1024, out_dtype=None):
    """x: (B, input_size). prepared_params: output of prepare_params().

    out_dtype: pass jnp.bfloat16 to halve the output HBM stream if downstream
    consumers tolerate bf16 (sigmoid output in [0,1] loses little).
    """
    B, input_size = x.shape
    in_pad = prepared_params[0][0].shape[0]      # padded input width
    out_pad = prepared_params[-1][0].shape[1]    # padded output width
    out_dtype = x.dtype if out_dtype is None else out_dtype

    # Feature-dim padding only (rare: input_size is usually 128-aligned).
    # The batch dim is NOT padded: Pallas masks the ragged last block.
    if in_pad != input_size:
        x = jnp.pad(x, ((0, 0), (0, in_pad - input_size)))

    # Batch tile selection:
    #  - large default tile amortizes the ~0.35us per-grid-step overhead
    #    (kernel is HBM-bound, not MXU-bound),
    #  - small batches are not blown up past round_up(B, 8),
    #  - large batches are split into >= 2 "parallel" steps so both v7x
    #    TensorCores run,
    #  - hard cap at 1024 rows keeps VMEM well inside v7x's 64 MiB.
    tile = min(batch_tile, 1024, _round_up(B, 8))
    if B > 256:
        tile = min(tile, _round_up(pl.cdiv(B, 2), 8))
    grid_steps = pl.cdiv(B, tile)

    flat_args = []
    in_specs = [pl.BlockSpec((tile, in_pad), lambda i: (i, 0))]
    for (w, b) in prepared_params:
        flat_args.extend([w, b])
        # Constant block index across the grid -> Pallas does not re-DMA weights.
        in_specs.append(pl.BlockSpec(w.shape, lambda i: (0, 0)))
        in_specs.append(pl.BlockSpec(b.shape, lambda i: (0, 0)))
    out_spec = pl.BlockSpec((tile, out_pad), lambda i: (i, 0))

    # Advisory cost estimate for XLA scheduling.
    flops = 2 * B * sum(int(w.shape[0]) * int(w.shape[1])
                        for w, _ in prepared_params)
    transcendentals = B * out_pad  # sigmoid
    bytes_accessed = (x.size * x.dtype.itemsize
                      + B * out_pad * jnp.dtype(out_dtype).itemsize
                      + sum(w.size * w.dtype.itemsize + b.size * b.dtype.itemsize
                            for w, b in prepared_params))

    out = pl.pallas_call(
        _autoencoder_kernel,
        out_shape=jax.ShapeDtypeStruct((B, out_pad), out_dtype),
        grid=(grid_steps,),
        in_specs=in_specs,
        out_specs=out_spec,
        compiler_params=pltpu.CompilerParams(
            dimension_semantics=("parallel",)),
        cost_estimate=pl.CostEstimate(
            flops=flops,
            transcendentals=transcendentals,
            bytes_accessed=bytes_accessed),
    )(x, *flat_args)

    if out_pad != input_size:
        out = out[:, :input_size]
    return out


def init_params(key, input_size, latent_size):
    """Deterministic init mimicking nn.Linear default (uniform +-1/sqrt(fan_in)).
    Weights are stored transposed: (in_features, out_features)."""
    dims = [(input_size, 128), (128, 64), (64, latent_size),      # encoder
            (latent_size, 64), (64, 128), (128, input_size)]      # decoder
    params = []
    for (fan_in, fan_out) in dims:
        key, kw, kb = jax.random.split(key, 3)
        bound = 1.0 / jnp.sqrt(float(fan_in))
        w = jax.random.uniform(kw, (fan_in, fan_out), jnp.float32, -bound, bound)
        b = jax.random.uniform(kb, (fan_out,), jnp.float32, -bound, bound)
        params.append((w, b))
    return params


def reference_forward(x, params):
    """Pure-JAX f32 reference for the same (un-fused) forward pass."""
    h = x
    for idx, (w, b) in enumerate(params):
        h = h @ w + b
        if idx in (0, 1, 3, 4):
            h = jnp.maximum(h, 0.0)
    return jax.nn.sigmoid(h)


if __name__ == "__main__":
    INPUT_SIZE = 256
    LATENT_SIZE = 32
    BATCH = 8

    key = jax.random.PRNGKey(0)
    key, kx = jax.random.split(key)
    x = jax.random.uniform(kx, (BATCH, INPUT_SIZE), jnp.float32)  # image-like [0,1)

    params = init_params(key, INPUT_SIZE, LATENT_SIZE)
    prepped = prepare_params(params, INPUT_SIZE)   # one-time: fuse + pad + bf16 cast

    out = autoencoder_forward(x, prepped)
    out = jax.block_until_ready(out)

    ref = reference_forward(x, params)
    assert out.shape == (BATCH, INPUT_SIZE)
    # bf16 matmul operands with f32 accumulation -> relaxed tolerance vs f32 ref.
    assert jnp.allclose(out, ref, atol=3e-2, rtol=3e-2), "mismatch vs reference"

    print("KERNEL_OK")
</pallas_src>

<mosaic_0001>
module attributes {stable_mosaic.version = 11 : i64} {
  func.func @_autoencoder_kernel(%arg0: i32, %arg1: memref<8x256xf32, #tpu.memory_space<vmem>>, %arg2: memref<256x128xbf16, #tpu.memory_space<vmem>>, %arg3: memref<1x128xf32, #tpu.memory_space<vmem>>, %arg4: memref<128x128xbf16, #tpu.memory_space<vmem>>, %arg5: memref<1x128xf32, #tpu.memory_space<vmem>>, %arg6: memref<128x128xbf16, #tpu.memory_space<vmem>>, %arg7: memref<1x128xf32, #tpu.memory_space<vmem>>, %arg8: memref<128x128xbf16, #tpu.memory_space<vmem>>, %arg9: memref<1x128xf32, #tpu.memory_space<vmem>>, %arg10: memref<128x256xbf16, #tpu.memory_space<vmem>>, %arg11: memref<1x256xf32, #tpu.memory_space<vmem>>, %arg12: memref<8x256xf32, #tpu.memory_space<vmem>>) attributes {dimension_semantics = [#tpu.dimension_semantics<parallel>], iteration_bounds = array<i64: 1>, scalar_prefetch = 0 : i64, scratch_operands = 0 : i64, tpu.core_type = #tpu.core_type<tc>, window_params = [{transform_indices = @transform_0, window_bounds = array<i64: 8, 256>}, {pipeline_mode = #tpu.pipeline_mode<synchronous>, transform_indices = @transform_1, window_bounds = array<i64: 256, 128>}, {pipeline_mode = #tpu.pipeline_mode<synchronous>, transform_indices = @transform_2, window_bounds = array<i64: 1, 128>}, {pipeline_mode = #tpu.pipeline_mode<synchronous>, transform_indices = @transform_3, window_bounds = array<i64: 128, 128>}, {pipeline_mode = #tpu.pipeline_mode<synchronous>, transform_indices = @transform_4, window_bounds = array<i64: 1, 128>}, {pipeline_mode = #tpu.pipeline_mode<synchronous>, transform_indices = @transform_5, window_bounds = array<i64: 128, 128>}, {pipeline_mode = #tpu.pipeline_mode<synchronous>, transform_indices = @transform_6, window_bounds = array<i64: 1, 128>}, {pipeline_mode = #tpu.pipeline_mode<synchronous>, transform_indices = @transform_7, window_bounds = array<i64: 128, 128>}, {pipeline_mode = #tpu.pipeline_mode<synchronous>, transform_indices = @transform_8, window_bounds = array<i64: 1, 128>}, {pipeline_mode = #tpu.pipeline_mode<synchronous>, transform_indices = @transform_9, window_bounds = array<i64: 128, 256>}, {pipeline_mode = #tpu.pipeline_mode<synchronous>, transform_indices = @transform_10, window_bounds = array<i64: 1, 256>}, {transform_indices = @transform_11, window_bounds = array<i64: 8, 256>}]} {
    %c0 = arith.constant 0 : index
    %c0_0 = arith.constant 0 : index
    %0 = vector.load %arg1[%c0, %c0_0] : memref<8x256xf32, #tpu.memory_space<vmem>>, vector<8x256xf32>
    %1 = arith.truncf %0 : vector<8x256xf32> to vector<8x256xbf16>
    %c0_1 = arith.constant 0 : index
    %c0_2 = arith.constant 0 : index
    %2 = vector.load %arg2[%c0_1, %c0_2] : memref<256x128xbf16, #tpu.memory_space<vmem>>, vector<256x128xbf16>
    %cst = arith.constant dense<0.000000e+00> : vector<8x128xf32>
    %3 = tpu.matmul %1, %2, %cst {dimension_numbers = #tpu.dot_dimension_numbers<[1], [0], [0], [1], [0, 0, 1, 1], [], []>} : vector<8x256xbf16>, vector<256x128xbf16>, vector<8x128xf32> -> vector<8x128xf32>
    %c0_3 = arith.constant 0 : index
    %c0_4 = arith.constant 0 : index
    %4 = vector.load %arg3[%c0_3, %c0_4] : memref<1x128xf32, #tpu.memory_space<vmem>>, vector<1x128xf32>
    %5 = vector.broadcast %4 : vector<1x128xf32> to vector<8x128xf32>
    %6 = arith.addf %3, %5 : vector<8x128xf32>
    %cst_5 = arith.constant 0.000000e+00 : f32
    %7 = vector.broadcast %cst_5 : f32 to vector<8x128xf32>
    %8 = arith.maximumf %6, %7 : vector<8x128xf32>
    %9 = arith.truncf %8 : vector<8x128xf32> to vector<8x128xbf16>
    %c0_6 = arith.constant 0 : index
    %c0_7 = arith.constant 0 : index
    %10 = vector.load %arg4[%c0_6, %c0_7] : memref<128x128xbf16, #tpu.memory_space<vmem>>, vector<128x128xbf16>
    %cst_8 = arith.constant dense<0.000000e+00> : vector<8x128xf32>
    %11 = tpu.matmul %9, %10, %cst_8 {dimension_numbers = #tpu.dot_dimension_numbers<[1], [0], [0], [1], [0, 0, 1, 1], [], []>} : vector<8x128xbf16>, vector<128x128xbf16>, vector<8x128xf32> -> vector<8x128xf32>
    %c0_9 = arith.constant 0 : index
    %c0_10 = arith.constant 0 : index
    %12 = vector.load %arg5[%c0_9, %c0_10] : memref<1x128xf32, #tpu.memory_space<vmem>>, vector<1x128xf32>
    %13 = vector.broadcast %12 : vector<1x128xf32> to vector<8x128xf32>
    %14 = arith.addf %11, %13 : vector<8x128xf32>
    %cst_11 = arith.constant 0.000000e+00 : f32
    %15 = vector.broadcast %cst_11 : f32 to vector<8x128xf32>
    %16 = arith.maximumf %14, %15 : vector<8x128xf32>
    %17 = arith.truncf %16 : vector<8x128xf32> to vector<8x128xbf16>
    %c0_12 = arith.constant 0 : index
    %c0_13 = arith.constant 0 : index
    %18 = vector.load %arg6[%c0_12, %c0_13] : memref<128x128xbf16, #tpu.memory_space<vmem>>, vector<128x128xbf16>
    %cst_14 = arith.constant dense<0.000000e+00> : vector<8x128xf32>
    %19 = tpu.matmul %17, %18, %cst_14 {dimension_numbers = #tpu.dot_dimension_numbers<[1], [0], [0], [1], [0, 0, 1, 1], [], []>} : vector<8x128xbf16>, vector<128x128xbf16>, vector<8x128xf32> -> vector<8x128xf32>
    %c0_15 = arith.constant 0 : index
    %c0_16 = arith.constant 0 : index
    %20 = vector.load %arg7[%c0_15, %c0_16] : memref<1x128xf32, #tpu.memory_space<vmem>>, vector<1x128xf32>
    %21 = vector.broadcast %20 : vector<1x128xf32> to vector<8x128xf32>
    %22 = arith.addf %19, %21 : vector<8x128xf32>
    %cst_17 = arith.constant 0.000000e+00 : f32
    %23 = vector.broadcast %cst_17 : f32 to vector<8x128xf32>
    %24 = arith.maximumf %22, %23 : vector<8x128xf32>
    %25 = arith.truncf %24 : vector<8x128xf32> to vector<8x128xbf16>
    %c0_18 = arith.constant 0 : index
    %c0_19 = arith.constant 0 : index
    %26 = vector.load %arg8[%c0_18, %c0_19] : memref<128x128xbf16, #tpu.memory_space<vmem>>, vector<128x128xbf16>
    %cst_20 = arith.constant dense<0.000000e+00> : vector<8x128xf32>
    %27 = tpu.matmul %25, %26, %cst_20 {dimension_numbers = #tpu.dot_dimension_numbers<[1], [0], [0], [1], [0, 0, 1, 1], [], []>} : vector<8x128xbf16>, vector<128x128xbf16>, vector<8x128xf32> -> vector<8x128xf32>
    %c0_21 = arith.constant 0 : index
    %c0_22 = arith.constant 0 : index
    %28 = vector.load %arg9[%c0_21, %c0_22] : memref<1x128xf32, #tpu.memory_space<vmem>>, vector<1x128xf32>
    %29 = vector.broadcast %28 : vector<1x128xf32> to vector<8x128xf32>
    %30 = arith.addf %27, %29 : vector<8x128xf32>
    %cst_23 = arith.constant 0.000000e+00 : f32
    %31 = vector.broadcast %cst_23 : f32 to vector<8x128xf32>
    %32 = arith.maximumf %30, %31 : vector<8x128xf32>
    %33 = arith.truncf %32 : vector<8x128xf32> to vector<8x128xbf16>
    %c0_24 = arith.constant 0 : index
    %c0_25 = arith.constant 0 : index
    %34 = vector.load %arg10[%c0_24, %c0_25] : memref<128x256xbf16, #tpu.memory_space<vmem>>, vector<128x256xbf16>
    %cst_26 = arith.constant dense<0.000000e+00> : vector<8x256xf32>
    %35 = tpu.matmul %33, %34, %cst_26 {dimension_numbers = #tpu.dot_dimension_numbers<[1], [0], [0], [1], [0, 0, 1, 1], [], []>} : vector<8x128xbf16>, vector<128x256xbf16>, vector<8x256xf32> -> vector<8x256xf32>
    %c0_27 = arith.constant 0 : index
    %c0_28 = arith.constant 0 : index
    %36 = vector.load %arg11[%c0_27, %c0_28] : memref<1x256xf32, #tpu.memory_space<vmem>>, vector<1x256xf32>
    %37 = vector.broadcast %36 : vector<1x256xf32> to vector<8x256xf32>
    %38 = arith.addf %35, %37 : vector<8x256xf32>
    %39 = arith.negf %38 : vector<8x256xf32>
    %40 = math.exp %39 : vector<8x256xf32>
    %cst_29 = arith.constant 1.000000e+00 : f32
    %41 = vector.broadcast %cst_29 : f32 to vector<8x256xf32>
    %42 = arith.addf %41, %40 : vector<8x256xf32>
    %43 = arith.divf %41, %42 : vector<8x256xf32>
    %c0_30 = arith.constant 0 : index
    %c0_31 = arith.constant 0 : index
    %44 = vector.load %arg12[%c0_30, %c0_31] : memref<8x256xf32, #tpu.memory_space<vmem>>, vector<8x256xf32>
    tpu.vector_store %arg12[%c0_30, %c0_31], %43 {strides = array<i32>} : memref<8x256xf32, #tpu.memory_space<vmem>>, vector<8x256xf32>,
    return
  }
  func.func @transform_0(%arg0: i32) -> (i32, i32) {
    %c0_i32 = arith.constant 0 : i32
    %c0_i32_0 = arith.constant 0 : i32
    return %arg0, %c0_i32 : i32, i32
  }
  func.func @transform_1(%arg0: i32) -> (i32, i32) {
    %c0_i32 = arith.constant 0 : i32
    %c0_i32_0 = arith.constant 0 : i32
    %c0_i32_1 = arith.constant 0 : i32
    return %c0_i32, %c0_i32_0 : i32, i32
  }
  func.func @transform_2(%arg0: i32) -> (i32, i32) {
    %c0_i32 = arith.constant 0 : i32
    %c0_i32_0 = arith.constant 0 : i32
    %c0_i32_1 = arith.constant 0 : i32
    return %c0_i32, %c0_i32_0 : i32, i32
  }
  func.func @transform_3(%arg0: i32) -> (i32, i32) {
    %c0_i32 = arith.constant 0 : i32
    %c0_i32_0 = arith.constant 0 : i32
    %c0_i32_1 = arith.constant 0 : i32
    return %c0_i32, %c0_i32_0 : i32, i32
  }
  func.func @transform_4(%arg0: i32) -> (i32, i32) {
    %c0_i32 = arith.constant 0 : i32
    %c0_i32_0 = arith.constant 0 : i32
    %c0_i32_1 = arith.constant 0 : i32
    return %c0_i32, %c0_i32_0 : i32, i32
  }
  func.func @transform_5(%arg0: i32) -> (i32, i32) {
    %c0_i32 = arith.constant 0 : i32
    %c0_i32_0 = arith.constant 0 : i32
    %c0_i32_1 = arith.constant 0 : i32
    return %c0_i32, %c0_i32_0 : i32, i32
  }
  func.func @transform_6(%arg0: i32) -> (i32, i32) {
    %c0_i32 = arith.constant 0 : i32
    %c0_i32_0 = arith.constant 0 : i32
    %c0_i32_1 = arith.constant 0 : i32
    return %c0_i32, %c0_i32_0 : i32, i32
  }
  func.func @transform_7(%arg0: i32) -> (i32, i32) {
    %c0_i32 = arith.constant 0 : i32
    %c0_i32_0 = arith.constant 0 : i32
    %c0_i32_1 = arith.constant 0 : i32
    return %c0_i32, %c0_i32_0 : i32, i32
  }
  func.func @transform_8(%arg0: i32) -> (i32, i32) {
    %c0_i32 = arith.constant 0 : i32
    %c0_i32_0 = arith.constant 0 : i32
    %c0_i32_1 = arith.constant 0 : i32
    return %c0_i32, %c0_i32_0 : i32, i32
  }
  func.func @transform_9(%arg0: i32) -> (i32, i32) {
    %c0_i32 = arith.constant 0 : i32
    %c0_i32_0 = arith.constant 0 : i32
    %c0_i32_1 = arith.constant 0 : i32
    return %c0_i32, %c0_i32_0 : i32, i32
  }
  func.func @transform_10(%arg0: i32) -> (i32, i32) {
    %c0_i32 = arith.constant 0 : i32
    %c0_i32_0 = arith.constant 0 : i32
    %c0_i32_1 = arith.constant 0 : i32
    return %c0_i32, %c0_i32_0 : i32, i32
  }
  func.func @transform_11(%arg0: i32) -> (i32, i32) {
    %c0_i32 = arith.constant 0 : i32
    %c0_i32_0 = arith.constant 0 : i32
    return %arg0, %c0_i32 : i32, i32
  }
}

</mosaic_0001>

<llo_original>
// kernel: tpu_custom_call.1
$region0: #{tpu_custom_call.1}
  #allocation0 [shape = 'u32[]', space=smem, size = 0x4, offset = 0x4, fixed_abs, tag = 'smem constant byte address 0x4 - core index']
  #allocation1 [shape = 'u32[72,128]{1,0:T(1,128)}', space=vmem, size = 0x9000, scoped, tag = 'internal scratch']
  %s0 = inlined_call_operand.hbm [shape: f32[8,256], index: 0, kind: input, shape index: {}]
  %s1 = inlined_call_operand.hbm [shape: bf16[256,128], index: 1, kind: input, shape index: {}]
  %s2 = inlined_call_operand.vmem [shape: f32[1,128], index: 2, kind: input, shape index: {}]
  %s3 = inlined_call_operand.hbm [shape: bf16[128,128], index: 3, kind: input, shape index: {}]
  %s4 = inlined_call_operand.hbm [shape: f32[1,128], index: 4, kind: input, shape index: {}]
  %s5 = inlined_call_operand.hbm [shape: bf16[128,128], index: 5, kind: input, shape index: {}]
  %s6 = inlined_call_operand.vmem [shape: f32[1,128], index: 6, kind: input, shape index: {}]
  %s7 = inlined_call_operand.hbm [shape: bf16[128,128], index: 7, kind: input, shape index: {}]
  %s8 = inlined_call_operand.vmem [shape: f32[1,128], index: 8, kind: input, shape index: {}]
  %s9 = inlined_call_operand.hbm [shape: bf16[128,256], index: 9, kind: input, shape index: {}]
  %s10 = inlined_call_operand.vmem [shape: f32[1,256], index: 10, kind: input, shape index: {}]
  %s11 = inlined_call_operand.hbm [shape: f32[8,256], index: 11, kind: output, shape index: {}]
  %s12 = sld [smem:[#allocation0]]
  $region82: #{tpu_custom_call.1} parent=0
    _
  %s14 = ssub.s32 1, %s12
  %s15 = scalar_select 0, %s14, %s12
  $region1: #{tpu_custom_call.1} parent=0
    #allocation2 [shape = 'u8[8192]{0}', space=vmem, size = 0x2000, scoped, tag = 'input window, operand 0, single buffered']
    #allocation3 [shape = 's32[1]{0}', space=sflag, size = 0x4, scoped, tag = 'scoped memory for tpu_custom_call.1']
    #allocation4 [shape = 's32[1]{0}', space=sflag, size = 0x4, scoped, tag = 'scoped memory for tpu_custom_call.1']
    #allocation5 [shape = 'u8[65536]{0}', space=vmem, size = 0x10000, scoped, tag = 'input window, operand 1, single buffered']
    #allocation6 [shape = 's32[1]{0}', space=sflag, size = 0x4, scoped, tag = 'scoped memory for tpu_custom_call.1']
    #allocation7 [shape = 'u8[32768]{0}', space=vmem, size = 0x8000, scoped, tag = 'input window, operand 3, single buffered']
    #allocation8 [shape = 'u8[512]{0}', space=vmem, size = 0x400, scoped, tag = 'input window, operand 4, single buffered']
    #allocation9 [shape = 's32[1]{0}', space=sflag, size = 0x4, scoped, tag = 'scoped memory for tpu_custom_call.1']
    #allocation10 [shape = 'u8[32768]{0}', space=vmem, size = 0x8000, scoped, tag = 'input window, operand 5, single buffered']
    #allocation11 [shape = 'u8[32768]{0}', space=vmem, size = 0x8000, scoped, tag = 'input window, operand 7, single buffered']
    #allocation12 [shape = 's32[1]{0}', space=sflag, size = 0x4, scoped, tag = 'scoped memory for tpu_custom_call.1']
    #allocation13 [shape = 'u8[65536]{0}', space=vmem, size = 0x10000, scoped, tag = 'input window, operand 9, single buffered']
    #allocation14 [shape = 'u8[8192]{0}', space=vmem, size = 0x2000, scoped, tag = 'output window, operand 0, single buffered']
    %16 = vsyncpa [#allocation3], 0
    %17 = vsyncpa [#allocation6], 0
    %18 = vsyncpa [#allocation9], 0
    %19 = vsyncpa [#allocation12], 0
    %20 = vsyncpa [#allocation4], 0
    // Predicated region
    $region2: #{tpu_custom_call.1} parent=1 // pred_check
      _
    $region3: #{tpu_custom_call.1} parent=1 // pred_check_branch
      %22 = sbr.rel (0) target = $region5
    $region4: #{tpu_custom_call.1} parent=1 // pred_region
      %24 = vsyncadd [#allocation3], 0
      %s26 = sshll.u32 %s0, 4
      %s27 = int_to_ptr.hbm [resolvable:$true] %s26
      %s28 = sshll.u32 [#allocation2], 4
      %s29 = int_to_ptr.vmem [resolvable:$true] %s28
      %31 = dma.hbm_to_vmem [thread:$0]  %s27, 256, %s29, [#allocation3]
    $region5: #{tpu_custom_call.1} parent=1 // pred_fallthru
      _
    // Predicated region
    $region6: #{tpu_custom_call.1} parent=1 // pred_check
      _
    $region7: #{tpu_custom_call.1} parent=1 // pred_check_branch
      %33 = sbr.rel (0) target = $region9
    $region8: #{tpu_custom_call.1} parent=1 // pred_region
      %35 = vsyncadd [#allocation6], 0
      %s36 = sshll.u32 %s1, 4
      %s37 = int_to_ptr.hbm [resolvable:$true] %s36
      %s38 = sshll.u32 [#allocation5], 4
      %s39 = int_to_ptr.vmem [resolvable:$true] %s38
      %44 = dma.hbm_to_vmem [thread:$0]  %s37, 2048, %s39, [#allocation6], 64, 64, 4
    $region9: #{tpu_custom_call.1} parent=1 // pred_fallthru
      _
    // Predicated region
    $region10: #{tpu_custom_call.1} parent=1 // pred_check
      _
    $region11: #{tpu_custom_call.1} parent=1 // pred_check_branch
      %46 = sbr.rel (0) target = $region13
    $region12: #{tpu_custom_call.1} parent=1 // pred_region
      _
    $region13: #{tpu_custom_call.1} parent=1 // pred_fallthru
      _
    // Predicated region
    $region14: #{tpu_custom_call.1} parent=1 // pred_check
      _
    $region15: #{tpu_custom_call.1} parent=1 // pred_check_branch
      %48 = sbr.rel (0) target = $region17
    $region16: #{tpu_custom_call.1} parent=1 // pred_region
      %50 = vsyncadd [#allocation6], 0
      %s51 = sshll.u32 %s3, 4
      %s52 = int_to_ptr.hbm [resolvable:$true] %s51
      %s53 = sshll.u32 [#allocation7], 4
      %s54 = int_to_ptr.vmem [resolvable:$true] %s53
      %59 = dma.hbm_to_vmem [thread:$0]  %s52, 1024, %s54, [#allocation6], 64, 64, 4
    $region17: #{tpu_custom_call.1} parent=1 // pred_fallthru
      _
    // Predicated region
    $region18: #{tpu_custom_call.1} parent=1 // pred_check
      _
    $region19: #{tpu_custom_call.1} parent=1 // pred_check_branch
      %61 = sbr.rel (0) target = $region21
    $region20: #{tpu_custom_call.1} parent=1 // pred_region
      %63 = vsyncadd [#allocation9], 0
      %s65 = sshll.u32 %s4, 4
      %s66 = int_to_ptr.hbm [resolvable:$true] %s65
      %s67 = sshll.u32 [#allocation8], 4
      %s68 = int_to_ptr.vmem [resolvable:$true] %s67
      %70 = dma.hbm_to_vmem [thread:$0]  %s66, 16, %s68, [#allocation9]
    $region21: #{tpu_custom_call.1} parent=1 // pred_fallthru
      _
    // Predicated region
    $region22: #{tpu_custom_call.1} parent=1 // pred_check
      _
    $region23: #{tpu_custom_call.1} parent=1 // pred_check_branch
      %72 = sbr.rel (0) target = $region25
    $region24: #{tpu_custom_call.1} parent=1 // pred_region
      %74 = vsyncadd [#allocation9], 0
      %s75 = sshll.u32 %s5, 4
      %s76 = int_to_ptr.hbm [resolvable:$true] %s75
      %s77 = sshll.u32 [#allocation10], 4
      %s78 = int_to_ptr.vmem [resolvable:$true] %s77
      %83 = dma.hbm_to_vmem [thread:$0]  %s76, 1024, %s78, [#allocation9], 64, 64, 4
    $region25: #{tpu_custom_call.1} parent=1 // pred_fallthru
      _
    // Predicated region
    $region26: #{tpu_custom_call.1} parent=1 // pred_check
      _
    $region27: #{tpu_custom_call.1} parent=1 // pred_check_branch
      %85 = sbr.rel (0) target = $region29
    $region28: #{tpu_custom_call.1} parent=1 // pred_region
      _
    $region29: #{tpu_custom_call.1} parent=1 // pred_fallthru
      _
    // Predicated region
    $region30: #{tpu_custom_call.1} parent=1 // pred_check
      _
    $region31: #{tpu_custom_call.1} parent=1 // pred_check_branch
      %87 = sbr.rel (0) target = $region33
    $region32: #{tpu_custom_call.1} parent=1 // pred_region
      %89 = vsyncadd [#allocation12], 0
      %s90 = sshll.u32 %s7, 4
      %s91 = int_to_ptr.hbm [resolvable:$true] %s90
      %s92 = sshll.u32 [#allocation11], 4
      %s93 = int_to_ptr.vmem [resolvable:$true] %s92
      %98 = dma.hbm_to_vmem [thread:$0]  %s91, 1024, %s93, [#allocation12], 64, 64, 4
    $region33: #{tpu_custom_call.1} parent=1 // pred_fallthru
      _
    // Predicated region
    $region34: #{tpu_custom_call.1} parent=1 // pred_check
      _
    $region35: #{tpu_custom_call.1} parent=1 // pred_check_branch
      %100 = sbr.rel (0) target = $region37
    $region36: #{tpu_custom_call.1} parent=1 // pred_region
      _
    $region37: #{tpu_custom_call.1} parent=1 // pred_fallthru
      _
    // Predicated region
    $region38: #{tpu_custom_call.1} parent=1 // pred_check
      _
    $region39: #{tpu_custom_call.1} parent=1 // pred_check_branch
      %102 = sbr.rel (0) target = $region41
    $region40: #{tpu_custom_call.1} parent=1 // pred_region
      %104 = vsyncadd [#allocation12], 0
      %s105 = sshll.u32 %s9, 4
      %s106 = int_to_ptr.hbm [resolvable:$true] %s105
      %s107 = sshll.u32 [#allocation13], 4
      %s108 = int_to_ptr.vmem [resolvable:$true] %s107
      %113 = dma.hbm_to_vmem [thread:$0]  %s106, 2048, %s108, [#allocation12], 128, 128, 8
    $region41: #{tpu_custom_call.1} parent=1 // pred_fallthru
      _
    // Predicated region
    $region42: #{tpu_custom_call.1} parent=1 // pred_check
      _
    $region43: #{tpu_custom_call.1} parent=1 // pred_check_branch
      %115 = sbr.rel (0) target = $region45
    $region44: #{tpu_custom_call.1} parent=1 // pred_region
      _
    $region45: #{tpu_custom_call.1} parent=1 // pred_fallthru
      _
    // Predicated region
    $region46: #{tpu_custom_call.1} parent=1 // pred_check
      _
    $region47: #{tpu_custom_call.1} parent=1 // pred_check_branch
      %117 = sbr.rel (0) target = $region49
    $region48: #{tpu_custom_call.1} parent=1 // pred_region
      %119 = dma.done [#allocation3], 256
    $region49: #{tpu_custom_call.1} parent=1 // pred_fallthru
      _
    // Predicated region
    $region50: #{tpu_custom_call.1} parent=1 // pred_check
      _
    $region51: #{tpu_custom_call.1} parent=1 // pred_check_branch
      %121 = sbr.rel (0) target = $region53
    $region52: #{tpu_custom_call.1} parent=1 // pred_region
      %123 = dma.done [#allocation6], 2048
    $region53: #{tpu_custom_call.1} parent=1 // pred_fallthru
      _
    // Predicated region
    $region54: #{tpu_custom_call.1} parent=1 // pred_check
      _
    $region55: #{tpu_custom_call.1} parent=1 // pred_check_branch
      %125 = sbr.rel (0) target = $region57
    $region56: #{tpu_custom_call.1} parent=1 // pred_region
      %127 = dma.done [#allocation6], 1024
    $region57: #{tpu_custom_call.1} parent=1 // pred_fallthru
      _
    // Predicated region
    $region58: #{tpu_custom_call.1} parent=1 // pred_check
      _
    $region59: #{tpu_custom_call.1} parent=1 // pred_check_branch
      %129 = sbr.rel (0) target = $region61
    $region60: #{tpu_custom_call.1} parent=1 // pred_region
      %131 = dma.done [#allocation9], 16
    $region61: #{tpu_custom_call.1} parent=1 // pred_fallthru
      _
    // Predicated region
    $region62: #{tpu_custom_call.1} parent=1 // pred_check
      _
    $region63: #{tpu_custom_call.1} parent=1 // pred_check_branch
      %133 = sbr.rel (0) target = $region65
    $region64: #{tpu_custom_call.1} parent=1 // pred_region
      %135 = dma.done [#allocation9], 1024
    $region65: #{tpu_custom_call.1} parent=1 // pred_fallthru
      _
    // Predicated region
    $region66: #{tpu_custom_call.1} parent=1 // pred_check
      _
    $region67: #{tpu_custom_call.1} parent=1 // pred_check_branch
      %137 = sbr.rel (0) target = $region69
    $region68: #{tpu_custom_call.1} parent=1 // pred_region
      %139 = dma.done [#allocation12], 1024
    $region69: #{tpu_custom_call.1} parent=1 // pred_fallthru
      _
    // Predicated region
    $region70: #{tpu_custom_call.1} parent=1 // pred_check
      _
    $region71: #{tpu_custom_call.1} parent=1 // pred_check_branch
      %141 = sbr.rel (0) target = $region73
    $region72: #{tpu_custom_call.1} parent=1 // pred_region
      %143 = dma.done [#allocation12], 2048
    $region73: #{tpu_custom_call.1} parent=1 // pred_fallthru
      _
    %v144 = vld [vmem:[#allocation2] sm:$0xff]
    %v145 = vld [vmem:[#allocation2 + $0x8] sm:$0xff]
    %v146 = vpack.c.bf16 %v144, %v144
    %v147 = vpack.c.bf16 %v145, %v145
    %v148 = vld [vmem:[#allocation5] sm:$0xf]
    %v149 = vld [vmem:[#allocation5 + $0x4] sm:$0xf]
    %v150 = vld [vmem:[#allocation5 + $0x8] sm:$0xf]
    %v151 = vld [vmem:[#allocation5 + $0xc] sm:$0xf]
    %v152 = vld [vmem:[#allocation5 + $0x10] sm:$0xf]
    %v153 = vld [vmem:[#allocation5 + $0x14] sm:$0xf]
    %v154 = vld [vmem:[#allocation5 + $0x18] sm:$0xf]
    %v155 = vld [vmem:[#allocation5 + $0x1c] sm:$0xf]
    %v156 = vld [vmem:[#allocation5 + $0x20] sm:$0xf]
    %v157 = vld [vmem:[#allocation5 + $0x24] sm:$0xf]
    %v158 = vld [vmem:[#allocation5 + $0x28] sm:$0xf]
    %v159 = vld [vmem:[#allocation5 + $0x2c] sm:$0xf]
    %v160 = vld [vmem:[#allocation5 + $0x30] sm:$0xf]
    %v161 = vld [vmem:[#allocation5 + $0x34] sm:$0xf]
    %v162 = vld [vmem:[#allocation5 + $0x38] sm:$0xf]
    %v163 = vld [vmem:[#allocation5 + $0x3c] sm:$0xf]
    %v164 = vld [vmem:[#allocation5 + $0x40] sm:$0xf]
    %v165 = vld [vmem:[#allocation5 + $0x44] sm:$0xf]
    %v166 = vld [vmem:[#allocation5 + $0x48] sm:$0xf]
    %v167 = vld [vmem:[#allocation5 + $0x4c] sm:$0xf]
    %v168 = vld [vmem:[#allocation5 + $0x50] sm:$0xf]
    %v169 = vld [vmem:[#allocation5 + $0x54] sm:$0xf]
    %v170 = vld [vmem:[#allocation5 + $0x58] sm:$0xf]
    %v171 = vld [vmem:[#allocation5 + $0x5c] sm:$0xf]
    %v172 = vld [vmem:[#allocation5 + $0x60] sm:$0xf]
    %v173 = vld [vmem:[#allocation5 + $0x64] sm:$0xf]
    %v174 = vld [vmem:[#allocation5 + $0x68] sm:$0xf]
    %v175 = vld [vmem:[#allocation5 + $0x6c] sm:$0xf]
    %v176 = vld [vmem:[#allocation5 + $0x70] sm:$0xf]
    %v177 = vld [vmem:[#allocation5 + $0x74] sm:$0xf]
    %v178 = vld [vmem:[#allocation5 + $0x78] sm:$0xf]
    %v179 = vld [vmem:[#allocation5 + $0x7c] sm:$0xf]
    %v180 = vld [vmem:[%s2] sm:$0x1]
    %v182 = vperm.slane %v180, 0
    %v216 = vunpack.c.l.b16 %v148
    %v217 = vunpack.c.l.b16 %v149
    %v218 = vunpack.c.l.b16 %v150
    %v219 = vunpack.c.l.b16 %v151
    %v220 = vunpack.c.l.b16 %v152
    %v221 = vunpack.c.l.b16 %v153
    %v222 = vunpack.c.l.b16 %v154
    %v223 = vunpack.c.l.b16 %v155
    %v224 = vunpack.c.l.b16 %v156
    %v225 = vunpack.c.l.b16 %v157
    %v226 = vunpack.c.l.b16 %v158
    %v227 = vunpack.c.l.b16 %v159
    %v228 = vunpack.c.l.b16 %v160
    %v229 = vunpack.c.l.b16 %v161
    %v230 = vunpack.c.l.b16 %v162
    %v231 = vunpack.c.l.b16 %v163
    %v232 = vunpack.c.l.b16 %v164
    %v233 = vunpack.c.l.b16 %v165
    %v234 = vunpack.c.l.b16 %v166
    %v235 = vunpack.c.l.b16 %v167
    %v236 = vunpack.c.l.b16 %v168
    %v237 = vunpack.c.l.b16 %v169
    %v238 = vunpack.c.l.b16 %v170
    %v239 = vunpack.c.l.b16 %v171
    %v240 = vunpack.c.l.b16 %v172
    %v241 = vunpack.c.l.b16 %v173
    %v242 = vunpack.c.l.b16 %v174
    %v243 = vunpack.c.l.b16 %v175
    %v244 = vunpack.c.l.b16 %v176
    %v245 = vunpack.c.l.b16 %v177
    %v246 = vunpack.c.l.b16 %v178
    %v247 = vunpack.c.l.b16 %v179
    %v248 = vpack.c.b16 %v217, %v216
    %v249 = vpack.c.b16 %v219, %v218
    %v250 = vpack.c.b16 %v221, %v220
    %v251 = vpack.c.b16 %v223, %v222
    %v252 = vpack.c.b16 %v225, %v224
    %v253 = vpack.c.b16 %v227, %v226
    %v254 = vpack.c.b16 %v229, %v228
    %v255 = vpack.c.b16 %v231, %v230
    %v256 = vpack.c.b16 %v233, %v232
    %v257 = vpack.c.b16 %v235, %v234
    %v258 = vpack.c.b16 %v237, %v236
    %v259 = vpack.c.b16 %v239, %v238
    %v260 = vpack.c.b16 %v241, %v240
    %v261 = vpack.c.b16 %v243, %v242
    %v262 = vpack.c.b16 %v245, %v244
    %v263 = vpack.c.b16 %v247, %v246
    %280 = vmatpush.bf16.msra.mxu0 %v255
    %281 = vmatpush.bf16.msra.mxu0 %v254
    %282 = vmatpush.bf16.msra.mxu0 %v253
    %283 = vmatpush.bf16.msra.mxu0 %v252
    %284 = vmatpush.bf16.msra.mxu0 %v251
    %285 = vmatpush.bf16.msra.mxu0 %v250
    %286 = vmatpush.bf16.msra.mxu0 %v249
    %287 = vmatpush.bf16.msra.mxu0 %v248
    %288 = vmatmul.bf16.gmra.mxu0 %v146
    %v289 = vpop.f32.mrf.mxu0
    %v290 = vadd.f32 %v182, %v289
    %v291 = vpop.f32.mrf.mxu0
    %292 = vdwg.mxu0
    %293 = vmatpush.bf16.msra.mxu0 %v263
    %294 = vmatpush.bf16.msra.mxu0 %v262
    %295 = vmatpush.bf16.msra.mxu0 %v261
    %296 = vmatpush.bf16.msra.mxu0 %v260
    %297 = vmatpush.bf16.msra.mxu0 %v259
    %298 = vmatpush.bf16.msra.mxu0 %v258
    %299 = vmatpush.bf16.msra.mxu0 %v257
    %300 = vmatpush.bf16.msra.mxu0 %v256
    %301 = vmatmul.bf16.gmra.mxu0 %v147
    %v302 = vpop.f32.mrf.mxu0
    %v303 = vadd.f32 %v290, %v302
    %v304 = vpop.f32.mrf.mxu0
    %305 = vdwg.mxu0
    %v306 = vmax.f32 %v303, 0.0
    %v307 = vpack.c.bf16 %v306, %v306
    %v308 = vld [vmem:[#allocation7] sm:$0xf]
    %v309 = vld [vmem:[#allocation7 + $0x4] sm:$0xf]
    %v310 = vld [vmem:[#allocation7 + $0x8] sm:$0xf]
    %v311 = vld [vmem:[#allocation7 + $0xc] sm:$0xf]
    %v312 = vld [vmem:[#allocation7 + $0x10] sm:$0xf]
    %v313 = vld [vmem:[#allocation7 + $0x14] sm:$0xf]
    %v314 = vld [vmem:[#allocation7 + $0x18] sm:$0xf]
    %v315 = vld [vmem:[#allocation7 + $0x1c] sm:$0xf]
    %v316 = vld [vmem:[#allocation7 + $0x20] sm:$0xf]
    %v317 = vld [vmem:[#allocation7 + $0x24] sm:$0xf]
    %v318 = vld [vmem:[#allocation7 + $0x28] sm:$0xf]
    %v319 = vld [vmem:[#allocation7 + $0x2c] sm:$0xf]
    %v320 = vld [vmem:[#allocation7 + $0x30] sm:$0xf]
    %v321 = vld [vmem:[#allocation7 + $0x34] sm:$0xf]
    %v322 = vld [vmem:[#allocation7 + $0x38] sm:$0xf]
    %v323 = vld [vmem:[#allocation7 + $0x3c] sm:$0xf]
    %v324 = vld [vmem:[#allocation8] sm:$0x1]
    %v326 = vperm.slane %v324, 0
    %v344 = vunpack.c.l.b16 %v308
    %v345 = vunpack.c.l.b16 %v309
    %v346 = vunpack.c.l.b16 %v310
    %v347 = vunpack.c.l.b16 %v311
    %v348 = vunpack.c.l.b16 %v312
    %v349 = vunpack.c.l.b16 %v313
    %v350 = vunpack.c.l.b16 %v314
    %v351 = vunpack.c.l.b16 %v315
    %v352 = vunpack.c.l.b16 %v316
    %v353 = vunpack.c.l.b16 %v317
    %v354 = vunpack.c.l.b16 %v318
    %v355 = vunpack.c.l.b16 %v319
    %v356 = vunpack.c.l.b16 %v320
    %v357 = vunpack.c.l.b16 %v321
    %v358 = vunpack.c.l.b16 %v322
    %v359 = vunpack.c.l.b16 %v323
    %v360 = vpack.c.b16 %v345, %v344
    %v361 = vpack.c.b16 %v347, %v346
    %v362 = vpack.c.b16 %v349, %v348
    %v363 = vpack.c.b16 %v351, %v350
    %v364 = vpack.c.b16 %v353, %v352
    %v365 = vpack.c.b16 %v355, %v354
    %v366 = vpack.c.b16 %v357, %v356
    %v367 = vpack.c.b16 %v359, %v358
    %376 = vmatpush.bf16.msra.mxu0 %v367
    %377 = vmatpush.bf16.msra.mxu0 %v366
    %378 = vmatpush.bf16.msra.mxu0 %v365
    %379 = vmatpush.bf16.msra.mxu0 %v364
    %380 = vmatpush.bf16.msra.mxu0 %v363
    %381 = vmatpush.bf16.msra.mxu0 %v362
    %382 = vmatpush.bf16.msra.mxu0 %v361
    %383 = vmatpush.bf16.msra.mxu0 %v360
    %384 = vmatmul.bf16.gmra.mxu0 %v307
    %v385 = vpop.f32.mrf.mxu0
    %v386 = vadd.f32 %v326, %v385
    %v387 = vpop.f32.mrf.mxu0
    %388 = vdwg.mxu0
    %v389 = vmax.f32 %v386, 0.0
    %v390 = vpack.c.bf16 %v389, %v389
    %v391 = vld [vmem:[#allocation10] sm:$0xf]
    %v392 = vld [vmem:[#allocation10 + $0x4] sm:$0xf]
    %v393 = vld [vmem:[#allocation10 + $0x8] sm:$0xf]
    %v394 = vld [vmem:[#allocation10 + $0xc] sm:$0xf]
    %v395 = vld [vmem:[#allocation10 + $0x10] sm:$0xf]
    %v396 = vld [vmem:[#allocation10 + $0x14] sm:$0xf]
    %v397 = vld [vmem:[#allocation10 + $0x18] sm:$0xf]
    %v398 = vld [vmem:[#allocation10 + $0x1c] sm:$0xf]
    %v399 = vld [vmem:[#allocation10 + $0x20] sm:$0xf]
    %v400 = vld [vmem:[#allocation10 + $0x24] sm:$0xf]
    %v401 = vld [vmem:[#allocation10 + $0x28] sm:$0xf]
    %v402 = vld [vmem:[#allocation10 + $0x2c] sm:$0xf]
    %v403 = vld [vmem:[#allocation10 + $0x30] sm:$0xf]
    %v404 = vld [vmem:[#allocation10 + $0x34] sm:$0xf]
    %v405 = vld [vmem:[#allocation10 + $0x38] sm:$0xf]
    %v406 = vld [vmem:[#allocation10 + $0x3c] sm:$0xf]
    %v407 = vld [vmem:[%s6] sm:$0x1]
    %v409 = vperm.slane %v407, 0
    %v427 = vunpack.c.l.b16 %v391
    %v428 = vunpack.c.l.b16 %v392
    %v429 = vunpack.c.l.b16 %v393
    %v430 = vunpack.c.l.b16 %v394
    %v431 = vunpack.c.l.b16 %v395
    %v432 = vunpack.c.l.b16 %v396
    %v433 = vunpack.c.l.b16 %v397
    %v434 = vunpack.c.l.b16 %v398
    %v435 = vunpack.c.l.b16 %v399
    %v436 = vunpack.c.l.b16 %v400
    %v437 = vunpack.c.l.b16 %v401
    %v438 = vunpack.c.l.b16 %v402
    %v439 = vunpack.c.l.b16 %v403
    %v440 = vunpack.c.l.b16 %v404
    %v441 = vunpack.c.l.b16 %v405
    %v442 = vunpack.c.l.b16 %v406
    %v443 = vpack.c.b16 %v428, %v427
    %v444 = vpack.c.b16 %v430, %v429
    %v445 = vpack.c.b16 %v432, %v431
    %v446 = vpack.c.b16 %v434, %v433
    %v447 = vpack.c.b16 %v436, %v435
    %v448 = vpack.c.b16 %v438, %v437
    %v449 = vpack.c.b16 %v440, %v439
    %v450 = vpack.c.b16 %v442, %v441
    %459 = vmatpush.bf16.msra.mxu0 %v450
    %460 = vmatpush.bf16.msra.mxu0 %v449
    %461 = vmatpush.bf16.msra.mxu0 %v448
    %462 = vmatpush.bf16.msra.mxu0 %v447
    %463 = vmatpush.bf16.msra.mxu0 %v446
    %464 = vmatpush.bf16.msra.mxu0 %v445
    %465 = vmatpush.bf16.msra.mxu0 %v444
    %466 = vmatpush.bf16.msra.mxu0 %v443
    %467 = vmatmul.bf16.gmra.mxu0 %v390
    %v468 = vpop.f32.mrf.mxu0
    %v469 = vadd.f32 %v409, %v468
    %v470 = vpop.f32.mrf.mxu0
    %471 = vdwg.mxu0
    %v472 = vmax.f32 %v469, 0.0
    %v473 = vpack.c.bf16 %v472, %v472
    %v474 = vld [vmem:[#allocation11] sm:$0xf]
    %v475 = vld [vmem:[#allocation11 + $0x4] sm:$0xf]
    %v476 = vld [vmem:[#allocation11 + $0x8] sm:$0xf]
    %v477 = vld [vmem:[#allocation11 + $0xc] sm:$0xf]
    %v478 = vld [vmem:[#allocation11 + $0x10] sm:$0xf]
    %v479 = vld [vmem:[#allocation11 + $0x14] sm:$0xf]
    %v480 = vld [vmem:[#allocation11 + $0x18] sm:$0xf]
    %v481 = vld [vmem:[#allocation11 + $0x1c] sm:$0xf]
    %v482 = vld [vmem:[#allocation11 + $0x20] sm:$0xf]
    %v483 = vld [vmem:[#allocation11 + $0x24] sm:$0xf]
    %v484 = vld [vmem:[#allocation11 + $0x28] sm:$0xf]
    %v485 = vld [vmem:[#allocation11 + $0x2c] sm:$0xf]
    %v486 = vld [vmem:[#allocation11 + $0x30] sm:$0xf]
    %v487 = vld [vmem:[#allocation11 + $0x34] sm:$0xf]
    %v488 = vld [vmem:[#allocation11 + $0x38] sm:$0xf]
    %v489 = vld [vmem:[#allocation11 + $0x3c] sm:$0xf]
    %v490 = vld [vmem:[%s8] sm:$0x1]
    %v492 = vperm.slane %v490, 0
    %v510 = vunpack.c.l.b16 %v474
    %v511 = vunpack.c.l.b16 %v475
    %v512 = vunpack.c.l.b16 %v476
    %v513 = vunpack.c.l.b16 %v477
    %v514 = vunpack.c.l.b16 %v478
    %v515 = vunpack.c.l.b16 %v479
    %v516 = vunpack.c.l.b16 %v480
    %v517 = vunpack.c.l.b16 %v481
    %v518 = vunpack.c.l.b16 %v482
    %v519 = vunpack.c.l.b16 %v483
    %v520 = vunpack.c.l.b16 %v484
    %v521 = vunpack.c.l.b16 %v485
    %v522 = vunpack.c.l.b16 %v486
    %v523 = vunpack.c.l.b16 %v487
    %v524 = vunpack.c.l.b16 %v488
    %v525 = vunpack.c.l.b16 %v489
    %v526 = vpack.c.b16 %v511, %v510
    %v527 = vpack.c.b16 %v513, %v512
    %v528 = vpack.c.b16 %v515, %v514
    %v529 = vpack.c.b16 %v517, %v516
    %v530 = vpack.c.b16 %v519, %v518
    %v531 = vpack.c.b16 %v521, %v520
    %v532 = vpack.c.b16 %v523, %v522
    %v533 = vpack.c.b16 %v525, %v524
    %542 = vmatpush.bf16.msra.mxu0 %v533
    %543 = vmatpush.bf16.msra.mxu0 %v532
    %544 = vmatpush.bf16.msra.mxu0 %v531
    %545 = vmatpush.bf16.msra.mxu0 %v530
    %546 = vmatpush.bf16.msra.mxu0 %v529
    %547 = vmatpush.bf16.msra.mxu0 %v528
    %548 = vmatpush.bf16.msra.mxu0 %v527
    %549 = vmatpush.bf16.msra.mxu0 %v526
    %550 = vmatmul.bf16.gmra.mxu0 %v473
    %v551 = vpop.f32.mrf.mxu0
    %v552 = vadd.f32 %v492, %v551
    %v553 = vpop.f32.mrf.mxu0
    %554 = vdwg.mxu0
    %v555 = vmax.f32 %v552, 0.0
    %v556 = vpack.c.bf16 %v555, %v555
    %v557 = vld [vmem:[#allocation13] sm:$0xff]
    %v558 = vld [vmem:[#allocation13 + $0x8] sm:$0xff]
    %v559 = vld [vmem:[#allocation13 + $0x10] sm:$0xff]
    %v560 = vld [vmem:[#allocation13 + $0x18] sm:$0xff]
    %v561 = vld [vmem:[#allocation13 + $0x20] sm:$0xff]
    %v562 = vld [vmem:[#allocation13 + $0x28] sm:$0xff]
    %v563 = vld [vmem:[#allocation13 + $0x30] sm:$0xff]
    %v564 = vld [vmem:[#allocation13 + $0x38] sm:$0xff]
    %v565 = vld [vmem:[#allocation13 + $0x40] sm:$0xff]
    %v566 = vld [vmem:[#allocation13 + $0x48] sm:$0xff]
    %v567 = vld [vmem:[#allocation13 + $0x50] sm:$0xff]
    %v568 = vld [vmem:[#allocation13 + $0x58] sm:$0xff]
    %v569 = vld [vmem:[#allocation13 + $0x60] sm:$0xff]
    %v570 = vld [vmem:[#allocation13 + $0x68] sm:$0xff]
    %v571 = vld [vmem:[#allocation13 + $0x70] sm:$0xff]
    %v572 = vld [vmem:[#allocation13 + $0x78] sm:$0xff]
    %v573 = vld [vmem:[%s10] sm:$0x3]
    %v575 = vperm.slane %v573, 0
    %v576 = vperm.slane %v573, 1
    %v595 = vunpack.c.l.b16 %v557
    %v596 = vunpack.c.h.b16 %v557
    %v597 = vunpack.c.l.b16 %v558
    %v598 = vunpack.c.h.b16 %v558
    %v599 = vunpack.c.l.b16 %v559
    %v600 = vunpack.c.h.b16 %v559
    %v601 = vunpack.c.l.b16 %v560
    %v602 = vunpack.c.h.b16 %v560
    %v603 = vunpack.c.l.b16 %v561
    %v604 = vunpack.c.h.b16 %v561
    %v605 = vunpack.c.l.b16 %v562
    %v606 = vunpack.c.h.b16 %v562
    %v607 = vunpack.c.l.b16 %v563
    %v608 = vunpack.c.h.b16 %v563
    %v609 = vunpack.c.l.b16 %v564
    %v610 = vunpack.c.h.b16 %v564
    %v611 = vunpack.c.l.b16 %v565
    %v612 = vunpack.c.h.b16 %v565
    %v613 = vunpack.c.l.b16 %v566
    %v614 = vunpack.c.h.b16 %v566
    %v615 = vunpack.c.l.b16 %v567
    %v616 = vunpack.c.h.b16 %v567
    %v617 = vunpack.c.l.b16 %v568
    %v618 = vunpack.c.h.b16 %v568
    %v619 = vunpack.c.l.b16 %v569
    %v620 = vunpack.c.h.b16 %v569
    %v621 = vunpack.c.l.b16 %v570
    %v622 = vunpack.c.h.b16 %v570
    %v623 = vunpack.c.l.b16 %v571
    %v624 = vunpack.c.h.b16 %v571
    %v625 = vunpack.c.l.b16 %v572
    %v626 = vunpack.c.h.b16 %v572
    %v627 = vpack.c.b16 %v597, %v595
    %v628 = vpack.c.b16 %v598, %v596
    %v629 = vpack.c.b16 %v601, %v599
    %v630 = vpack.c.b16 %v602, %v600
    %v631 = vpack.c.b16 %v605, %v603
    %v632 = vpack.c.b16 %v606, %v604
    %v633 = vpack.c.b16 %v609, %v607
    %v634 = vpack.c.b16 %v610, %v608
    %v635 = vpack.c.b16 %v613, %v611
    %v636 = vpack.c.b16 %v614, %v612
    %v637 = vpack.c.b16 %v617, %v615
    %v638 = vpack.c.b16 %v618, %v616
    %v639 = vpack.c.b16 %v621, %v619
    %v640 = vpack.c.b16 %v622, %v620
    %v641 = vpack.c.b16 %v625, %v623
    %v642 = vpack.c.b16 %v626, %v624
    %659 = vmatpush.bf16.msra.mxu0 %v641
    %660 = vmatpush.bf16.msra.mxu0 %v639
    %661 = vmatpush.bf16.msra.mxu0 %v637
    %662 = vmatpush.bf16.msra.mxu0 %v635
    %663 = vmatpush.bf16.msra.mxu0 %v633
    %664 = vmatpush.bf16.msra.mxu0 %v631
    %665 = vmatpush.bf16.msra.mxu0 %v629
    %666 = vmatpush.bf16.msra.mxu0 %v627
    %667 = vmatmul.bf16.gmra.mxu0 %v556
    %v668 = vpop.f32.mrf.mxu0
    %v669 = vadd.f32 %v575, %v668
    %v670 = vpop.f32.mrf.mxu0
    %671 = vdwg.mxu0
    %672 = vmatpush.bf16.msra.mxu0 %v642
    %673 = vmatpush.bf16.msra.mxu0 %v640
    %674 = vmatpush.bf16.msra.mxu0 %v638
    %675 = vmatpush.bf16.msra.mxu0 %v636
    %676 = vmatpush.bf16.msra.mxu0 %v634
    %677 = vmatpush.bf16.msra.mxu0 %v632
    %678 = vmatpush.bf16.msra.mxu0 %v630
    %679 = vmatpush.bf16.msra.mxu0 %v628
    %680 = vmatmul.bf16.gmra.mxu0 %v556
    %v681 = vpop.f32.mrf.mxu0
    %v682 = vadd.f32 %v576, %v681
    %v683 = vpop.f32.mrf.mxu0
    %684 = vdwg.mxu0
    %v685 = vxor.u32 %v669, 2147483648
    %v686 = vxor.u32 %v682, 2147483648
    %v687 = vmul.f32 %v685, 1.442695
    %v688 = vpow.pop %v687
    %v689 = vmul.f32 %v686, 1.442695
    %v690 = vpow.pop %v689
    %v691 = vadd.f32 %v688, 1.0
    %v692 = vadd.f32 %v690, 1.0
    %v693 = vrcp.pop %v691
    %v694 = vmul.f32 %v691, %v693
    %v695 = vsub.f32 1.0, %v694
    %v696 = vmul.f32 %v693, %v695
    %v697 = vadd.f32 %v693, %v696
    %vm698 = vweird.f32 %v691
    %vm699 = vweird.f32 %v693
    %vm700 = vmor %vm698, %vm699
    %v701 = vsel %vm700, %v693, %v697
    %v702 = vand.u32 2147483647, %v691
    %vm703 = vcmp.eq.f32.partialorder %v702, 8.507059e+37
    %v704 = vand.u32 %v691, 2147483648
    %v705 = vor.u32 1.1754944e-38, %v704
    %v706 = vsel %vm703, %v705, %v701
    %v707 = vmul.f32 1.0, %v706
    %v708 = vrcp.pop %v692
    %v709 = vmul.f32 %v692, %v708
    %v710 = vsub.f32 1.0, %v709
    %v711 = vmul.f32 %v708, %v710
    %v712 = vadd.f32 %v708, %v711
    %vm713 = vweird.f32 %v692
    %vm714 = vweird.f32 %v708
    %vm715 = vmor %vm713, %vm714
    %v716 = vsel %vm715, %v708, %v712
    %v717 = vand.u32 2147483647, %v692
    %vm718 = vcmp.eq.f32.partialorder %v717, 8.507059e+37
    %v719 = vand.u32 %v692, 2147483648
    %v720 = vor.u32 1.1754944e-38, %v719
    %v721 = vsel %vm718, %v720, %v716
    %v722 = vmul.f32 1.0, %v721
    %723 = vst [vmem:[#allocation14] sm:$0xff] %v707
    %724 = vst [vmem:[#allocation14 + $0x8] sm:$0xff] %v722
    // Predicated region
    $region74: #{tpu_custom_call.1} parent=1 // pred_check
      _
    $region75: #{tpu_custom_call.1} parent=1 // pred_check_branch
      %726 = sbr.rel (0) target = $region77
    $region76: #{tpu_custom_call.1} parent=1 // pred_region
      %728 = vsyncadd [#allocation4], 0
      %s730 = sshll.u32 [#allocation14], 4
      %s731 = int_to_ptr.vmem [resolvable:$true] %s730
      %s732 = sshll.u32 %s11, 4
      %s733 = int_to_ptr.hbm [resolvable:$true] %s732
      %735 = dma.vmem_to_hbm [thread:$0]  %s731, 256, %s733, [#allocation4]
    $region77: #{tpu_custom_call.1} parent=1 // pred_fallthru
      _
    // Predicated region
    $region78: #{tpu_custom_call.1} parent=1 // pred_check
      _
    $region79: #{tpu_custom_call.1} parent=1 // pred_check_branch
      %737 = sbr.rel (0) target = $region81
    $region80: #{tpu_custom_call.1} parent=1 // pred_region
      %739 = dma.done [#allocation4], 256
    $region81: #{tpu_custom_call.1} parent=1 // pred_fallthru
      _
    %740 = vsyncpa [#allocation3], 1
    %741 = vsyncpa [#allocation6], 1
    %742 = vsyncpa [#allocation9], 1
    %743 = vsyncpa [#allocation12], 1
    %744 = vsyncpa [#allocation4], 1

</llo_original>
